<compile_context>
chip_gen: v7x
topology: tpu7x:2x2x1
jax: 0.10.0
libtpu: 0.0.40
codegen_flags: <defaults>
</compile_context>

<pallas_src>
import functools

import jax
import jax.numpy as jnp
from jax.experimental import pallas as pl
from jax.experimental.pallas import tpu as pltpu

IN_FEATURES = 100
K_PAD = 128          # contraction dim padded to one full lane tile
TM = 256             # batch tile used only when B > TM


def linear_kernel(x_ref, wt_ref, b_ref, o_ref):
    # x_ref:  (tm, K_PAD)   bf16
    # wt_ref: (K_PAD, C_PAD) bf16 (pre-transposed, pre-padded)
    # b_ref:  (1, C_PAD)    f32
    # o_ref:  (tm, C_PAD)   f32
    acc = jnp.dot(x_ref[...], wt_ref[...], preferred_element_type=jnp.float32)
    o_ref[...] = (acc + b_ref[...]).astype(o_ref.dtype)


def prepare_params(weight, bias):
    """One-time (init-time) parameter prep.

    weight: (num_classes, 100) f32  (PyTorch nn.Linear convention)
    bias:   (num_classes,)     f32
    Returns (wt_padded, bias_padded) with
      wt_padded:   (K_PAD, C_PAD) bf16  — transposed + zero-padded
      bias_padded: (1, C_PAD)     f32   — zero-padded
    """
    num_classes, in_features = weight.shape
    c_pad = pl.cdiv(num_classes, 128) * 128
    wt_padded = jnp.pad(
        weight.T, ((0, K_PAD - in_features), (0, c_pad - num_classes))
    ).astype(jnp.bfloat16)
    bias_padded = jnp.pad(bias, (0, c_pad - num_classes)).reshape(1, c_pad)
    bias_padded = bias_padded.astype(jnp.float32)
    return wt_padded, bias_padded


@functools.partial(jax.jit, static_argnames=("num_classes",))
def wav2lip_forward(x, wt_padded, bias_padded, *, num_classes):
    """logits = x @ weight.T + bias, using pre-prepared padded params."""
    B, in_features = x.shape
    k_pad, c_pad = wt_padded.shape

    # Pad K (100 -> 128) and cast to bf16; extra lanes hit zero weight rows.
    x_p = jnp.pad(x, ((0, 0), (0, k_pad - in_features))).astype(jnp.bfloat16)

    if B <= TM:
        # Tiny problem: no grid, whole operands resident in VMEM.
        out = pl.pallas_call(
            linear_kernel,
            out_shape=jax.ShapeDtypeStruct((B, c_pad), jnp.float32),
            in_specs=[
                pl.BlockSpec(memory_space=pltpu.MemorySpace.VMEM),
                pl.BlockSpec(memory_space=pltpu.MemorySpace.VMEM),
                pl.BlockSpec(memory_space=pltpu.MemorySpace.VMEM),
            ],
            out_specs=pl.BlockSpec(memory_space=pltpu.MemorySpace.VMEM),
        )(x_p, wt_padded, bias_padded)
    else:
        # Large batch: tile the batch dim, parallel across cores (v7x: 2 TCs).
        b_pad = pl.cdiv(B, TM) * TM
        if b_pad != B:
            x_p = jnp.pad(x_p, ((0, b_pad - B), (0, 0)))
        out = pl.pallas_call(
            linear_kernel,
            out_shape=jax.ShapeDtypeStruct((b_pad, c_pad), jnp.float32),
            grid=(b_pad // TM,),
            in_specs=[
                pl.BlockSpec((TM, k_pad), lambda i: (i, 0)),
                pl.BlockSpec((k_pad, c_pad), lambda i: (0, 0)),
                pl.BlockSpec((1, c_pad), lambda i: (0, 0)),
            ],
            out_specs=pl.BlockSpec((TM, c_pad), lambda i: (i, 0)),
            compiler_params=pltpu.CompilerParams(
                dimension_semantics=("parallel",)
            ),
        )(x_p, wt_padded, bias_padded)

    # Slice padded batch rows / padded classes back to the logical shape.
    return out[:B, :num_classes]


if __name__ == "__main__":
    num_classes = 32
    batch = 8
    in_features = IN_FEATURES

    key = jax.random.PRNGKey(0)
    kx, kw, kb, kx2 = jax.random.split(key, 4)

    # Deterministic synthetic parameters (shapes from nn.Linear(100, num_classes)).
    x = jax.random.normal(kx, (batch, in_features), dtype=jnp.float32)
    weight = jax.random.normal(kw, (num_classes, in_features), dtype=jnp.float32) * 0.1
    bias = jax.random.normal(kb, (num_classes,), dtype=jnp.float32) * 0.1

    # One-time parameter preparation (transpose + pad + bf16 cast).
    wt_padded, bias_padded = prepare_params(weight, bias)

    # --- Small-batch (no-grid) path ---
    logits = wav2lip_forward(x, wt_padded, bias_padded, num_classes=num_classes)
    jax.block_until_ready(logits)
    ref = x @ weight.T + bias
    assert logits.shape == (batch, num_classes)
    assert jnp.allclose(logits, ref, atol=5e-2, rtol=5e-2), "small-batch mismatch"

    # --- Large-batch (tiled, parallel) path, including ragged batch padding ---
    big_batch = 300  # > TM, not a multiple of TM -> exercises batch padding
    x_big = jax.random.normal(kx2, (big_batch, in_features), dtype=jnp.float32)
    logits_big = wav2lip_forward(
        x_big, wt_padded, bias_padded, num_classes=num_classes
    )
    jax.block_until_ready(logits_big)
    ref_big = x_big @ weight.T + bias
    assert logits_big.shape == (big_batch, num_classes)
    assert jnp.allclose(logits_big, ref_big, atol=5e-2, rtol=5e-2), "big-batch mismatch"

    print("KERNEL_OK")
</pallas_src>

<mosaic_0001>
module attributes {stable_mosaic.version = 11 : i64} {
  func.func @linear_kernel(%arg0: memref<8x128xbf16, #tpu.memory_space<vmem>>, %arg1: memref<128x128xbf16, #tpu.memory_space<vmem>>, %arg2: memref<1x128xf32, #tpu.memory_space<vmem>>, %arg3: memref<8x128xf32, #tpu.memory_space<vmem>>) attributes {dimension_semantics = [], scalar_prefetch = 0 : i64, scratch_operands = 0 : i64, tpu.core_type = #tpu.core_type<tc>} {
    %c0 = arith.constant 0 : index
    %c0_0 = arith.constant 0 : index
    %0 = vector.load %arg0[%c0, %c0_0] : memref<8x128xbf16, #tpu.memory_space<vmem>>, vector<8x128xbf16>
    %c0_1 = arith.constant 0 : index
    %c0_2 = arith.constant 0 : index
    %1 = vector.load %arg1[%c0_1, %c0_2] : memref<128x128xbf16, #tpu.memory_space<vmem>>, vector<128x128xbf16>
    %cst = arith.constant dense<0.000000e+00> : vector<8x128xf32>
    %2 = tpu.matmul %0, %1, %cst {dimension_numbers = #tpu.dot_dimension_numbers<[1], [0], [0], [1], [0, 0, 1, 1], [], []>} : vector<8x128xbf16>, vector<128x128xbf16>, vector<8x128xf32> -> vector<8x128xf32>
    %c0_3 = arith.constant 0 : index
    %c0_4 = arith.constant 0 : index
    %3 = vector.load %arg2[%c0_3, %c0_4] : memref<1x128xf32, #tpu.memory_space<vmem>>, vector<1x128xf32>
    %4 = vector.broadcast %3 : vector<1x128xf32> to vector<8x128xf32>
    %5 = arith.addf %2, %4 : vector<8x128xf32>
    %c0_5 = arith.constant 0 : index
    %c0_6 = arith.constant 0 : index
    %6 = vector.load %arg3[%c0_5, %c0_6] : memref<8x128xf32, #tpu.memory_space<vmem>>, vector<8x128xf32>
    tpu.vector_store %arg3[%c0_5, %c0_6], %5 {strides = array<i32>} : memref<8x128xf32, #tpu.memory_space<vmem>>, vector<8x128xf32>,
    return
  }
}

</mosaic_0001>

<llo_original>
// kernel: wav2lip_forward.1
$region0: #{wav2lip_forward.1}
  #allocation0 [shape = 'u32[]', space=smem, size = 0x4, offset = 0x4, fixed_abs, tag = 'smem constant byte address 0x4 - core index']
  #allocation1 [shape = 'u32[144,128]{1,0:T(1,128)}', space=vmem, size = 0x12000, scoped, tag = 'internal scratch']
  %s0 = inlined_call_operand.vmem [shape: bf16[8,128], index: 0, kind: input, shape index: {}]
  %s1 = inlined_call_operand.hbm [shape: bf16[128,128], index: 1, kind: input, shape index: {}]
  %s2 = inlined_call_operand.vmem [shape: f32[1,128], index: 2, kind: input, shape index: {}]
  %s3 = inlined_call_operand.hbm [shape: f32[8,128], index: 3, kind: output, shape index: {}]
  %s4 = sld [smem:[#allocation0]]
  $region26: #{wav2lip_forward.1} parent=0
    _
  %s6 = ssub.s32 1, %s4
  %s7 = scalar_select 0, %s6, %s4
  $region1: #{wav2lip_forward.1} parent=0
    #allocation2 [shape = 'u8[32768]{0}', space=vmem, size = 0x8000, scoped, tag = 'input window, operand 1, single buffered']
    #allocation3 [shape = 's32[1]{0}', space=sflag, size = 0x4, scoped, tag = 'scoped memory for wav2lip_forward.1']
    #allocation4 [shape = 's32[1]{0}', space=sflag, size = 0x4, scoped, tag = 'scoped memory for wav2lip_forward.1']
    #allocation5 [shape = 'u8[4096]{0}', space=vmem, size = 0x1000, scoped, tag = 'output window, operand 0, single buffered']
    %8 = vsyncpa [#allocation3], 0
    %9 = vsyncpa [#allocation4], 0
    // Predicated region
    $region2: #{wav2lip_forward.1} parent=1 // pred_check
      _
    $region3: #{wav2lip_forward.1} parent=1 // pred_check_branch
      %11 = sbr.rel (0) target = $region5
    $region4: #{wav2lip_forward.1} parent=1 // pred_region
      _
    $region5: #{wav2lip_forward.1} parent=1 // pred_fallthru
      _
    // Predicated region
    $region6: #{wav2lip_forward.1} parent=1 // pred_check
      _
    $region7: #{wav2lip_forward.1} parent=1 // pred_check_branch
      %13 = sbr.rel (0) target = $region9
    $region8: #{wav2lip_forward.1} parent=1 // pred_region
      %s15 = ssub.s32 1024, 1024
      %16 = vsyncadd [#allocation3], %s15
      %s17 = sshll.u32 [#allocation2], 4
      %s18 = int_to_ptr.vmem [resolvable:$true] %s17
      %23 = dma.hbm_to_vmem [thread:$0]  %s1, 1024, %s18, [#allocation3], 64, 64, 4
    $region9: #{wav2lip_forward.1} parent=1 // pred_fallthru
      _
    // Predicated region
    $region10: #{wav2lip_forward.1} parent=1 // pred_check
      _
    $region11: #{wav2lip_forward.1} parent=1 // pred_check_branch
      %25 = sbr.rel (0) target = $region13
    $region12: #{wav2lip_forward.1} parent=1 // pred_region
      _
    $region13: #{wav2lip_forward.1} parent=1 // pred_fallthru
      _
    // Predicated region
    $region14: #{wav2lip_forward.1} parent=1 // pred_check
      _
    $region15: #{wav2lip_forward.1} parent=1 // pred_check_branch
      %27 = sbr.rel (0) target = $region17
    $region16: #{wav2lip_forward.1} parent=1 // pred_region
      %28 = dma.done [#allocation3], 1024
    $region17: #{wav2lip_forward.1} parent=1 // pred_fallthru
      _
    %v30 = vld [vmem:[%s0] sm:$0xf]
    %v31 = vld [vmem:[#allocation2] sm:$0xf]
    %v32 = vld [vmem:[#allocation2 + $0x4] sm:$0xf]
    %v33 = vld [vmem:[#allocation2 + $0x8] sm:$0xf]
    %v34 = vld [vmem:[#allocation2 + $0xc] sm:$0xf]
    %v35 = vld [vmem:[#allocation2 + $0x10] sm:$0xf]
    %v36 = vld [vmem:[#allocation2 + $0x14] sm:$0xf]
    %v37 = vld [vmem:[#allocation2 + $0x18] sm:$0xf]
    %v38 = vld [vmem:[#allocation2 + $0x1c] sm:$0xf]
    %v39 = vld [vmem:[#allocation2 + $0x20] sm:$0xf]
    %v40 = vld [vmem:[#allocation2 + $0x24] sm:$0xf]
    %v41 = vld [vmem:[#allocation2 + $0x28] sm:$0xf]
    %v42 = vld [vmem:[#allocation2 + $0x2c] sm:$0xf]
    %v43 = vld [vmem:[#allocation2 + $0x30] sm:$0xf]
    %v44 = vld [vmem:[#allocation2 + $0x34] sm:$0xf]
    %v45 = vld [vmem:[#allocation2 + $0x38] sm:$0xf]
    %v46 = vld [vmem:[#allocation2 + $0x3c] sm:$0xf]
    %v47 = vld [vmem:[%s2] sm:$0x1]
    %v49 = vlaneseq
    %v50 = vshrl.u32 %v49, 7
    %v51 = vsub.s32 0, %v50
    %v52 = vrot.slane %v47, %v51
    %v70 = vunpack.c.l.b16 %v31
    %v71 = vunpack.c.l.b16 %v32
    %v72 = vunpack.c.l.b16 %v33
    %v73 = vunpack.c.l.b16 %v34
    %v74 = vunpack.c.l.b16 %v35
    %v75 = vunpack.c.l.b16 %v36
    %v76 = vunpack.c.l.b16 %v37
    %v77 = vunpack.c.l.b16 %v38
    %v78 = vunpack.c.l.b16 %v39
    %v79 = vunpack.c.l.b16 %v40
    %v80 = vunpack.c.l.b16 %v41
    %v81 = vunpack.c.l.b16 %v42
    %v82 = vunpack.c.l.b16 %v43
    %v83 = vunpack.c.l.b16 %v44
    %v84 = vunpack.c.l.b16 %v45
    %v85 = vunpack.c.l.b16 %v46
    %v86 = vpack.c.b16 %v71, %v70
    %v87 = vpack.c.b16 %v73, %v72
    %v88 = vpack.c.b16 %v75, %v74
    %v89 = vpack.c.b16 %v77, %v76
    %v90 = vpack.c.b16 %v79, %v78
    %v91 = vpack.c.b16 %v81, %v80
    %v92 = vpack.c.b16 %v83, %v82
    %v93 = vpack.c.b16 %v85, %v84
    %102 = vmatprep.subr.bf16.mxu0 0
    %103 = vmatpush1.bf16.msra.mxu0 %v86
    %104 = vmatprep.subr.bf16.mxu0 0
    %105 = vmatpush1.bf16.msra.mxu0 %v87
    %106 = vmatprep.subr.bf16.mxu0 0
    %107 = vmatpush1.bf16.msra.mxu0 %v88
    %108 = vmatprep.subr.bf16.mxu0 0
    %109 = vmatpush1.bf16.msra.mxu0 %v89
    %110 = vmatprep.subr.bf16.mxu0 0
    %111 = vmatpush1.bf16.msra.mxu0 %v90
    %112 = vmatprep.subr.bf16.mxu0 0
    %113 = vmatpush1.bf16.msra.mxu0 %v91
    %114 = vmatprep.subr.bf16.mxu0 0
    %115 = vmatpush1.bf16.msra.mxu0 %v92
    %116 = vmatprep.subr.bf16.mxu0 0
    %117 = vmatpush1.bf16.msra.mxu0 %v93
    %118 = vmatprep.subr.bf16.mxu0 0
    %119 = vmatpush1.bf16.msra.mxu0 0
    %120 = vmatprep.subr.bf16.mxu0 0
    %121 = vmatpush1.bf16.msra.mxu0 0
    %122 = vmatprep.subr.bf16.mxu0 0
    %123 = vmatpush1.bf16.msra.mxu0 0
    %124 = vmatprep.subr.bf16.mxu0 0
    %125 = vmatpush1.bf16.msra.mxu0 0
    %126 = vmatprep.subr.bf16.mxu0 0
    %127 = vmatpush1.bf16.msra.mxu0 0
    %128 = vmatprep.subr.bf16.mxu0 0
    %129 = vmatpush1.bf16.msra.mxu0 0
    %130 = vmatprep.subr.bf16.mxu0 0
    %131 = vmatpush1.bf16.msra.mxu0 0
    %132 = vmatprep.subr.bf16.mxu0 0
    %133 = vmatpush1.bf16.msra.mxu0 0
    %134 = vmatprep.mubr.bf16.mxu0 0
    %135 = vmatmul.mubr.bf16.gmra.mrb[0].mxu0 %v30
    %v136 = vpop.f32.mrb[0].mxu0
    %v137 = vadd.f32 %v52, %v136
    %v138 = vpop.f32.mrb[0].mxu0
    %v139 = vpop.f32.mrb[0].mxu0
    %v140 = vpop.f32.mrb[0].mxu0
    %141 = vdwg.mxu0
    %142 = vst [vmem:[#allocation5] sm:$0xff] %v137
    // Predicated region
    $region18: #{wav2lip_forward.1} parent=1 // pred_check
      _
    $region19: #{wav2lip_forward.1} parent=1 // pred_check_branch
      %144 = sbr.rel (0) target = $region21
    $region20: #{wav2lip_forward.1} parent=1 // pred_region
      %s146 = ssub.s32 128, 128
      %147 = vsyncadd [#allocation4], %s146
      %s149 = sshll.u32 [#allocation5], 4
      %s150 = int_to_ptr.vmem [resolvable:$true] %s149
      %152 = dma.vmem_to_hbm [thread:$0]  %s150, 128, %s3, [#allocation4]
    $region21: #{wav2lip_forward.1} parent=1 // pred_fallthru
      _
    // Predicated region
    $region22: #{wav2lip_forward.1} parent=1 // pred_check
      _
    $region23: #{wav2lip_forward.1} parent=1 // pred_check_branch
      %154 = sbr.rel (0) target = $region25
    $region24: #{wav2lip_forward.1} parent=1 // pred_region
      %155 = dma.done [#allocation4], 128
    $region25: #{wav2lip_forward.1} parent=1 // pred_fallthru
      _
    %156 = vsyncpa [#allocation3], 1
    %157 = vsyncpa [#allocation4], 1

</llo_original>
